<compile_context>
chip_gen: v7x
topology: tpu7x:2x2x1
jax: 0.10.0
libtpu: 0.0.40
codegen_flags: <defaults>
</compile_context>

<pallas_src>
import functools

import jax
import jax.numpy as jnp
from jax.experimental import pallas as pl
from jax.experimental.pallas import tpu as pltpu


# ----------------------------------------------------------------------------
# Gram matrix kernel: K-tiled reduction, accumulating directly into the output
# ----------------------------------------------------------------------------
def _gram_kernel(x_ref, g_ref, *, contract_axis):
    @pl.when(pl.program_id(1) == 0)
    def _():
        g_ref[...] = jnp.zeros_like(g_ref)

    x = x_ref[...]  # native dtype; MXU accumulates in f32
    g_ref[...] += jax.lax.dot_general(
        x, x,
        dimension_numbers=(((contract_axis,), (contract_axis,)), ((), ())),
        preferred_element_type=jnp.float32,
    )


def _round_up(v, m):
    return ((v + m - 1) // m) * m


def _vmem_capacity_bytes():
    """Per-TensorCore VMEM capacity; conservative default if the query fails."""
    try:
        info = pltpu.get_tpu_info()
        cap = getattr(info, "vmem_capacity_bytes", None)
        if cap:
            return int(cap)
    except Exception:  # pragma: no cover - defensive
        pass
    return 64 * 1024 * 1024  # v7x per-core VMEM; safe lower bound everywhere


def _plan_tiling(red, other, n, itemsize):
    """Pick (tile, n_splits, red_padded, vmem_limit) for the K-tiled Gram."""
    capacity = _vmem_capacity_bytes()
    # Leave headroom for Mosaic internal scratch / semaphores (matters on v7x).
    usable = min(capacity - 8 * 1024 * 1024, int(capacity * 0.85))
    usable = max(usable, 32 * 1024 * 1024)

    resident_out = 2 * n * n * 4           # (possibly double-buffered) f32 output
    input_budget = max(usable - resident_out, 4 * 1024 * 1024)

    red128 = _round_up(red, 128)

    # Largest 128-multiple tile whose double-buffered input blocks fit budget.
    max_tile = (input_budget // max(1, 2 * other * itemsize)) // 128 * 128
    max_tile = max(max_tile, 128)
    tile = min(max_tile, red128)
    # Keep at least 2 grid steps when the data allows it, so DMA overlaps compute.
    if red128 >= 256:
        tile = min(tile, max(128, (red128 // 2) // 128 * 128))

    # Split the reduction across a leading "parallel" axis (v7x megacore);
    # only when there is at least one full tile per split.
    n_splits = 2 if red128 >= 2 * tile else 1

    red_padded = _round_up(red, n_splits * tile)
    vmem_limit = int(usable)
    return tile, n_splits, red_padded, vmem_limit


def gram_matrix(x):
    """Returns the smaller Gram matrix of x (B, D):
       B <= D:  X @ X^T   -> (B, B), contraction over D (axis 1)
       B >  D:  X^T @ X   -> (D, D), contraction over B (axis 0)
    No transpose is materialized in HBM or VMEM."""
    B, D = x.shape
    itemsize = jnp.dtype(x.dtype).itemsize

    if B <= D:
        contract_axis, n, red, other = 1, B, D, B
    else:
        contract_axis, n, red, other = 0, D, B, D

    tile, n_splits, red_padded, vmem_limit = _plan_tiling(red, other, n, itemsize)

    # Zero-pad the reduction axis so the tile always divides it (zeros add
    # nothing to X X^T); keeps pipelining engaged and VMEM bounded.
    pad = red_padded - red
    if pad:
        if contract_axis == 1:
            x = jnp.pad(x, ((0, 0), (0, pad)))
        else:
            x = jnp.pad(x, ((0, pad), (0, 0)))

    steps_per_split = red_padded // (n_splits * tile)
    grid = (n_splits, steps_per_split)

    if contract_axis == 1:
        in_spec = pl.BlockSpec(
            (other, tile), lambda c, k: (0, c * steps_per_split + k))
    else:
        in_spec = pl.BlockSpec(
            (tile, other), lambda c, k: (c * steps_per_split + k, 0))

    out_spec = pl.BlockSpec((None, n, n), lambda c, k: (c, 0, 0))

    cost = pl.CostEstimate(
        flops=2 * n * n * red_padded,
        bytes_accessed=other * red_padded * itemsize + n_splits * n * n * 4,
        transcendentals=0,
    )

    kern = functools.partial(_gram_kernel, contract_axis=contract_axis)
    partials = pl.pallas_call(
        kern,
        out_shape=jax.ShapeDtypeStruct((n_splits, n, n), jnp.float32),
        grid=grid,
        in_specs=[in_spec],
        out_specs=out_spec,
        compiler_params=pltpu.CompilerParams(
            dimension_semantics=("parallel", "arbitrary"),
            vmem_limit_bytes=vmem_limit,
        ),
        cost_estimate=cost,
    )(x)

    # Tiny (n_splits, n, n) -> (n, n) sum; XLA fuses it with eigvalsh's prologue.
    return jnp.sum(partials, axis=0)


# ----------------------------------------------------------------------------
# Full BSD loss forward
# ----------------------------------------------------------------------------
def bsd_loss(feature, num_of_index):
    """feature: (B, D) float array (f32 or bf16). Returns scalar f32 loss."""
    g = gram_matrix(feature)                       # (min(B,D), min(B,D)) f32

    # TODO(synk): eigendecomposition (torch.svd's iterative solver) has no
    # clean Pallas equivalent; computed with jnp.linalg.eigvalsh on the Gram.
    eigs_asc = jnp.linalg.eigvalsh(g)              # ascending == s^2 ascending
    eigs_asc = jnp.maximum(eigs_asc, 0.0)          # s^2 >= 0 (numerical guard)

    n = eigs_asc.shape[0]
    k = int(num_of_index)
    # PyTorch s[-0:] selects ALL singular values; clamp to valid range.
    k = n if k <= 0 else min(k, n)
    mean_k_smallest = jnp.mean(eigs_asc[:k])
    return 1.0 / jnp.maximum(mean_k_smallest, jnp.float32(1e-6))


if __name__ == "__main__":
    key = jax.random.PRNGKey(0)
    B, D = 8, 32
    num_of_index = 4
    feature = jax.random.normal(key, (B, D), dtype=jnp.float32)

    loss = bsd_loss(feature, num_of_index)
    jax.block_until_ready(loss)

    # Sanity check against a pure-JAX SVD reference (tolerance relaxed for the
    # eigvalsh(X X^T) vs SVD precision gap on the smallest singular values).
    s = jnp.linalg.svd(feature, compute_uv=False)             # descending
    ref = 1.0 / jnp.maximum(jnp.mean(s[-num_of_index:] ** 2), 1e-6)
    assert jnp.allclose(loss, ref, rtol=1e-2, atol=1e-4), (loss, ref)

    # Also exercise the B > D branch (contraction over axis 0, no HBM transpose).
    feat_t = jax.random.normal(jax.random.PRNGKey(1), (32, 8), dtype=jnp.float32)
    loss_t = bsd_loss(feat_t, num_of_index)
    jax.block_until_ready(loss_t)
    s_t = jnp.linalg.svd(feat_t, compute_uv=False)
    ref_t = 1.0 / jnp.maximum(jnp.mean(s_t[-num_of_index:] ** 2), 1e-6)
    assert jnp.allclose(loss_t, ref_t, rtol=1e-2, atol=1e-4), (loss_t, ref_t)

    # num_of_index == 0 edge case (PyTorch s[-0:] == all of s): must be finite.
    loss0 = bsd_loss(feature, 0)
    jax.block_until_ready(loss0)
    assert bool(jnp.isfinite(loss0)), loss0

    print("KERNEL_OK")
</pallas_src>

<mosaic_0001>
module attributes {stable_mosaic.version = 11 : i64} {
  func.func @_gram_kernel(%arg0: i32, %arg1: i32, %arg2: memref<8x128xf32, #tpu.memory_space<vmem>>, %arg3: memref<1x8x8xf32, #tpu.memory_space<vmem>>) attributes {dimension_semantics = [#tpu.dimension_semantics<parallel>, #tpu.dimension_semantics<arbitrary>], iteration_bounds = array<i64: 1, 1>, scalar_prefetch = 0 : i64, scratch_operands = 0 : i64, tpu.core_type = #tpu.core_type<tc>, window_params = [{transform_indices = @transform_0, window_bounds = array<i64: 8, 128>}, {transform_indices = @transform_1, window_bounds = array<i64: 1, 8, 8>}]} {
    %c0_i32 = arith.constant 0 : i32
    %0 = arith.cmpi eq, %arg1, %c0_i32 : i32
    %1 = arith.extui %0 : i1 to i32
    %c0_i32_0 = arith.constant 0 : i32
    %2 = arith.cmpi ne, %1, %c0_i32_0 : i32
    scf.if %2 {
      %cst_8 = arith.constant 0.000000e+00 : f32
      %11 = vector.broadcast %cst_8 : f32 to vector<8x8xf32>
      %c0_9 = arith.constant 0 : index
      %c0_10 = arith.constant 0 : index
      %c0_11 = arith.constant 0 : index
      %12 = vector.load %arg3[%c0_9, %c0_10, %c0_11] : memref<1x8x8xf32, #tpu.memory_space<vmem>>, vector<1x8x8xf32>
      %13 = vector.shape_cast %12 : vector<1x8x8xf32> to vector<8x8xf32>
      %14 = vector.shape_cast %11 : vector<8x8xf32> to vector<1x8x8xf32>
      tpu.vector_store %arg3[%c0_9, %c0_10, %c0_11], %14 {strides = array<i32>} : memref<1x8x8xf32, #tpu.memory_space<vmem>>, vector<1x8x8xf32>,
    } else {
    }
    %c0 = arith.constant 0 : index
    %c0_1 = arith.constant 0 : index
    %3 = vector.load %arg2[%c0, %c0_1] : memref<8x128xf32, #tpu.memory_space<vmem>>, vector<8x128xf32>
    %c0_2 = arith.constant 0 : index
    %c0_3 = arith.constant 0 : index
    %c0_4 = arith.constant 0 : index
    %4 = vector.load %arg3[%c0_2, %c0_3, %c0_4] : memref<1x8x8xf32, #tpu.memory_space<vmem>>, vector<1x8x8xf32>
    %5 = vector.shape_cast %4 : vector<1x8x8xf32> to vector<8x8xf32>
    %cst = arith.constant dense<0.000000e+00> : vector<8x8xf32>
    %6 = tpu.matmul %3, %3, %cst {dimension_numbers = #tpu.dot_dimension_numbers<[1], [1], [0], [0], [0, 0, 1, 0], [], []>} : vector<8x128xf32>, vector<8x128xf32>, vector<8x8xf32> -> vector<8x8xf32>
    %7 = arith.addf %5, %6 : vector<8x8xf32>
    %c0_5 = arith.constant 0 : index
    %c0_6 = arith.constant 0 : index
    %c0_7 = arith.constant 0 : index
    %8 = vector.load %arg3[%c0_5, %c0_6, %c0_7] : memref<1x8x8xf32, #tpu.memory_space<vmem>>, vector<1x8x8xf32>
    %9 = vector.shape_cast %8 : vector<1x8x8xf32> to vector<8x8xf32>
    %10 = vector.shape_cast %7 : vector<8x8xf32> to vector<1x8x8xf32>
    tpu.vector_store %arg3[%c0_5, %c0_6, %c0_7], %10 {strides = array<i32>} : memref<1x8x8xf32, #tpu.memory_space<vmem>>, vector<1x8x8xf32>,
    return
  }
  func.func @transform_0(%arg0: i32, %arg1: i32) -> (i32, i32) {
    %c1_i32 = arith.constant 1 : i32
    %0 = arith.muli %arg0, %c1_i32 : i32
    %1 = arith.addi %0, %arg1 : i32
    %c0_i32 = arith.constant 0 : i32
    %c0_i32_0 = arith.constant 0 : i32
    return %c0_i32, %1 : i32, i32
  }
  func.func @transform_1(%arg0: i32, %arg1: i32) -> (i32, i32, i32) {
    %c0_i32 = arith.constant 0 : i32
    %c0_i32_0 = arith.constant 0 : i32
    %c0_i32_1 = arith.constant 0 : i32
    return %arg0, %c0_i32, %c0_i32_0 : i32, i32, i32
  }
}

</mosaic_0001>

<llo_original>
// kernel: tpu_custom_call.1
$region0: #{tpu_custom_call.1}
  #allocation0 [shape = 'u32[]', space=smem, size = 0x4, offset = 0x4, fixed_abs, tag = 'smem constant byte address 0x4 - core index']
  #allocation1 [shape = 'u32[144,128]{1,0:T(1,128)}', space=vmem, size = 0x12000, scoped, tag = 'internal scratch']
  %s0 = inlined_call_operand.hbm [shape: f32[8,128], index: 0, kind: input, shape index: {}]
  %s1 = inlined_call_operand.hbm [shape: f32[1,8,8], index: 1, kind: output, shape index: {}]
  %s2 = sld [smem:[#allocation0]]
  $region22: #{tpu_custom_call.1} parent=0
    _
  %s4 = ssub.s32 1, %s2
  %s5 = scalar_select 0, %s4, %s2
  $region1: #{tpu_custom_call.1} parent=0
    #allocation2 [shape = 'u8[4096]{0}', space=vmem, size = 0x1000, scoped, tag = 'input window, operand 0, single buffered']
    #allocation3 [shape = 's32[1]{0}', space=sflag, size = 0x4, scoped, tag = 'scoped memory for tpu_custom_call.1']
    #allocation4 [shape = 's32[1]{0}', space=sflag, size = 0x4, scoped, tag = 'scoped memory for tpu_custom_call.1']
    #allocation5 [shape = 'u8[4096]{0}', space=vmem, size = 0x1000, scoped, tag = 'output window, operand 0, single buffered']
    %6 = vsyncpa [#allocation3], 0
    %7 = vsyncpa [#allocation4], 0
    // Predicated region
    $region2: #{tpu_custom_call.1} parent=1 // pred_check
      _
    $region3: #{tpu_custom_call.1} parent=1 // pred_check_branch
      %9 = sbr.rel (0) target = $region5
    $region4: #{tpu_custom_call.1} parent=1 // pred_region
      %s10 = sadd.s32 0, 0
      %s12 = ssub.s32 128, 128
      %13 = vsyncadd [#allocation3], %s12
      %s14 = smul.addr %s10, 128
      %s15 = scalar_lea.hbm %s0, %s14
      %s17 = sshll.u32 [#allocation2], 4
      %s18 = int_to_ptr.vmem [resolvable:$true] %s17
      %20 = dma.hbm_to_vmem [thread:$0]  %s15, 128, %s18, [#allocation3]
    $region5: #{tpu_custom_call.1} parent=1 // pred_fallthru
      _
    // Predicated region
    $region6: #{tpu_custom_call.1} parent=1 // pred_check
      _
    $region7: #{tpu_custom_call.1} parent=1 // pred_check_branch
      %22 = sbr.rel (0) target = $region9
    $region8: #{tpu_custom_call.1} parent=1 // pred_region
      %23 = dma.done [#allocation3], 128
    $region9: #{tpu_custom_call.1} parent=1 // pred_fallthru
      _
    %s24 = sadd.s32 0, 0
    %p25 = scmp.eq.s32.totalorder 0, 0
    // Predicated region
    $region10: #{tpu_custom_call.1} parent=1 // pred_check
      %p26 = pneg %p25
    $region11: #{tpu_custom_call.1} parent=1 // pred_check_branch
      %28 = sbr.rel (%p26) target = $region13
    $region12: #{tpu_custom_call.1} parent=1 // pred_region
      %vm29 = vcmask 64512
      %30 = vst.msk [vmem:[#allocation5] sm:$0xff] %vm29, 0.0
    $region13: #{tpu_custom_call.1} parent=1 // pred_fallthru
      _
    %v31 = vld [vmem:[#allocation2] sm:$0xff]
    %v32 = vld [vmem:[#allocation5] sm:$0xff]
    %33 = vmatprep.subr.mxu0 0.0
    %34 = vmatpush1.xpose.msra.mxu0 %v31
    %35 = vmatprep.subr.mxu0 0.0
    %36 = vmatpush1.xpose.msra.mxu0 0.0
    %37 = vmatprep.subr.mxu0 0.0
    %38 = vmatpush1.xpose.msra.mxu0 0.0
    %39 = vmatprep.subr.mxu0 0.0
    %40 = vmatpush1.xpose.msra.mxu0 0.0
    %41 = vmatprep.subr.mxu0 0.0
    %42 = vmatpush1.xpose.msra.mxu0 0.0
    %43 = vmatprep.subr.mxu0 0.0
    %44 = vmatpush1.xpose.msra.mxu0 0.0
    %45 = vmatprep.subr.mxu0 0.0
    %46 = vmatpush1.xpose.msra.mxu0 0.0
    %47 = vmatprep.subr.mxu0 0.0
    %48 = vmatpush1.xpose.msra.mxu0 0.0
    %49 = vmatprep.subr.mxu0 0.0
    %50 = vmatpush1.xpose.msra.mxu0 0.0
    %51 = vmatprep.subr.mxu0 0.0
    %52 = vmatpush1.xpose.msra.mxu0 0.0
    %53 = vmatprep.subr.mxu0 0.0
    %54 = vmatpush1.xpose.msra.mxu0 0.0
    %55 = vmatprep.subr.mxu0 0.0
    %56 = vmatpush1.xpose.msra.mxu0 0.0
    %57 = vmatprep.subr.mxu0 0.0
    %58 = vmatpush1.xpose.msra.mxu0 0.0
    %59 = vmatprep.subr.mxu0 0.0
    %60 = vmatpush1.xpose.msra.mxu0 0.0
    %61 = vmatprep.subr.mxu0 0.0
    %62 = vmatpush1.xpose.msra.mxu0 0.0
    %63 = vmatprep.subr.mxu0 0.0
    %64 = vmatpush1.xpose.msra.mxu0 0.0
    %65 = vmatprep.subr.mxu0 0.0
    %66 = vmatpush1.xpose.msra.mxu0 0.0
    %67 = vmatprep.subr.mxu0 0.0
    %68 = vmatpush1.xpose.msra.mxu0 0.0
    %69 = vmatprep.subr.mxu0 0.0
    %70 = vmatpush1.xpose.msra.mxu0 0.0
    %71 = vmatprep.subr.mxu0 0.0
    %72 = vmatpush1.xpose.msra.mxu0 0.0
    %73 = vmatprep.subr.mxu0 0.0
    %74 = vmatpush1.xpose.msra.mxu0 0.0
    %75 = vmatprep.subr.mxu0 0.0
    %76 = vmatpush1.xpose.msra.mxu0 0.0
    %77 = vmatprep.subr.mxu0 0.0
    %78 = vmatpush1.xpose.msra.mxu0 0.0
    %79 = vmatprep.subr.mxu0 0.0
    %80 = vmatpush1.xpose.msra.mxu0 0.0
    %81 = vmatprep.subr.mxu0 0.0
    %82 = vmatpush1.xpose.msra.mxu0 0.0
    %83 = vmatprep.subr.mxu0 0.0
    %84 = vmatpush1.xpose.msra.mxu0 0.0
    %85 = vmatprep.subr.mxu0 0.0
    %86 = vmatpush1.xpose.msra.mxu0 0.0
    %87 = vmatprep.subr.mxu0 0.0
    %88 = vmatpush1.xpose.msra.mxu0 0.0
    %89 = vmatprep.subr.mxu0 0.0
    %90 = vmatpush1.xpose.msra.mxu0 0.0
    %91 = vmatprep.subr.mxu0 0.0
    %92 = vmatpush1.xpose.msra.mxu0 0.0
    %93 = vmatprep.subr.mxu0 0.0
    %94 = vmatpush1.xpose.msra.mxu0 0.0
    %95 = vmatprep.subr.mxu0 0.0
    %96 = vmatpush1.xpose.msra.mxu0 0.0
    %97 = vmatprep.mubr.f32.mxu0 0.0
    %98 = vmatmul.mubr.f32.gmra.mrb[0].mxu0 %v31
    %v99 = vpop.f32.mrb[0].mxu0
    %v100 = vadd.f32 0.0, %v99
    %v101 = vpop.f32.mrb[0].mxu0
    %102 = vdwg.mxu0
    %v103 = vadd.f32 %v32, %v100
    %vm104 = vcmask 64512
    %105 = vst.msk [vmem:[#allocation5] sm:$0xff] %vm104, %v103
    // Predicated region
    $region14: #{tpu_custom_call.1} parent=1 // pred_check
      _
    $region15: #{tpu_custom_call.1} parent=1 // pred_check_branch
      %107 = sbr.rel (0) target = $region17
    $region16: #{tpu_custom_call.1} parent=1 // pred_region
      %s109 = ssub.s32 128, 128
      %110 = vsyncadd [#allocation4], %s109
      %s112 = sshll.u32 [#allocation5], 4
      %s113 = int_to_ptr.vmem [resolvable:$true] %s112
      %115 = dma.vmem_to_hbm [thread:$0]  %s113, 128, %s1, [#allocation4]
    $region17: #{tpu_custom_call.1} parent=1 // pred_fallthru
      _
    // Predicated region
    $region18: #{tpu_custom_call.1} parent=1 // pred_check
      _
    $region19: #{tpu_custom_call.1} parent=1 // pred_check_branch
      %117 = sbr.rel (0) target = $region21
    $region20: #{tpu_custom_call.1} parent=1 // pred_region
      %118 = dma.done [#allocation4], 128
    $region21: #{tpu_custom_call.1} parent=1 // pred_fallthru
      _
    %119 = vsyncpa [#allocation3], 1
    %120 = vsyncpa [#allocation4], 1

</llo_original>
